<compile_context>
chip_gen: v5e
topology: v5e:2x2
jax: 0.10.0
libtpu: 0.0.40
codegen_flags: <defaults>
</compile_context>

<pallas_src>
import jax
import jax.numpy as jnp
from jax.experimental import pallas as pl
from jax.experimental.pallas import tpu as pltpu


def _round_up(x, m):
    return ((x + m - 1) // m) * m


def _softplus(x):
    # numerically stable softplus
    return jnp.maximum(x, 0.0) + jnp.log(1.0 + jnp.exp(-jnp.abs(x)))


# -----------------------------------------------------------------------------
# Pass 1: per-core partial segment sums + counts over row tiles of N.
#   grid = (nc "parallel", tiles-per-core "arbitrary"); accumulate directly
#   into the per-core output block (resident across the arbitrary axis).
# -----------------------------------------------------------------------------
def _segment_reduce_kernel(batch_ref, x_ref, s_out, cnt_out):
    i = pl.program_id(1)

    @pl.when(i == 0)
    def _():
        s_out[...] = jnp.zeros_like(s_out)
        cnt_out[...] = jnp.zeros_like(cnt_out)

    g_pad = s_out.shape[0]
    tm = x_ref.shape[0]

    # One-hot membership (transposed): onehot[g, i] = batch[i] == g.
    # Padding rows carry batch = -1 and contribute nothing.
    b_row = batch_ref[...]                                        # (1, TM) int32
    gids = jax.lax.broadcasted_iota(jnp.int32, (g_pad, tm), 0)    # (G_pad, TM)
    onehot = gids == b_row                                        # bool

    # bf16 hi/lo split of x: mt is exactly 0/1 in bf16, x_hi + x_lo ~ f32 x.
    mt = onehot.astype(jnp.bfloat16)
    x = x_ref[...]
    x_hi = x.astype(jnp.bfloat16)
    x_lo = (x - x_hi.astype(jnp.float32)).astype(jnp.bfloat16)

    s_out[...] += (jnp.dot(mt, x_hi, preferred_element_type=jnp.float32) +
                   jnp.dot(mt, x_lo, preferred_element_type=jnp.float32))
    # counts in f32 (exact); cross-lane reduce rides the XLU slot.
    cnt_out[...] += jnp.sum(onehot.astype(jnp.float32), axis=1, keepdims=True)


# -----------------------------------------------------------------------------
# Pass 2 (tiny, grid-less): combine per-core partials + per-graph GCN head.
# -----------------------------------------------------------------------------
def _head_kernel(s_ref, cnt_ref, w1_ref, b1_ref, w2_ref, b2_ref, w3_ref, b3_ref,
                 conf_ref):
    s = jnp.sum(s_ref[...], axis=0)                               # (G_pad, D)
    cnt = jnp.sum(cnt_ref[...], axis=0)                           # (G_pad, 1)

    # GCN layer 1 (per graph): h1 = relu(S @ W1 + b1)
    h1 = jnp.maximum(
        jnp.dot(s, w1_ref[...], preferred_element_type=jnp.float32,
                precision=jax.lax.Precision.HIGHEST) + b1_ref[...], 0.0)
    # adj @ h1 collapses to counts * h1 (h1 constant within each graph).
    a2 = cnt * h1
    # GCN layer 2 (per graph)
    h2 = jnp.maximum(
        jnp.dot(a2, w2_ref[...], preferred_element_type=jnp.float32,
                precision=jax.lax.Precision.HIGHEST) + b2_ref[...], 0.0)
    # Confidence head as a lane reduction (no width-1 MXU matmul).
    logit = jnp.sum(h2 * w3_ref[...], axis=-1, keepdims=True) + b3_ref[...]
    sp = _softplus(logit)
    conf_ref[...] = sp / (1.0 + sp)                               # (G_pad, 1)


def confidence_score(x, batch, params, *, num_graphs=None, nc=2):
    """x: (N, in_dim) f32; batch: (N,) int32 graph ids; params: unpadded weights.

    num_graphs: pass explicitly when calling under jit (otherwise derived from
    the concrete `batch`).  nc: number of parallel accumulator blocks (2 to
    use both TensorCores on v7x; harmless on v5e/v6e).
    """
    n, d = x.shape
    h = params["w1"].shape[1]
    h_pad = _round_up(h, 128)

    if num_graphs is None:
        # Requires a concrete batch; under jit pass num_graphs explicitly.
        num_graphs = int(jax.device_get(jnp.max(batch))) + 1
    g_pad = _round_up(max(num_graphs, 1), 8)

    # Row tile: lane-dense multiple of 128, ~2 MiB of x per tile (double-buffered
    # 4 MiB -> fits the VMEM budget on v5e/v6e/v7x), capped at 4096 rows.
    tm_cap = max(512, min(4096, (2 << 20) // (4 * max(d, 1))))
    tm_cap = max(128, (tm_cap // 128) * 128)
    tm = min(tm_cap, _round_up(pl.cdiv(n, nc), 128))
    t_per_core = pl.cdiv(n, nc * tm)
    n_pad = nc * t_per_core * tm

    # Row-pad only (batch = -1 marks padding nodes); feature dim stays = d.
    x_p = jnp.pad(x.astype(jnp.float32), ((0, n_pad - n), (0, 0)))
    batch_row = jnp.pad(batch.astype(jnp.int32), (0, n_pad - n),
                        constant_values=-1).reshape(1, n_pad)

    # Lane-dense weight padding (zeros keep the math exact).
    w1 = jnp.pad(params["w1"].astype(jnp.float32), ((0, 0), (0, h_pad - h)))
    b1 = jnp.pad(params["b1"].astype(jnp.float32), ((0, 0), (0, h_pad - h)))
    w2 = jnp.pad(params["w2"].astype(jnp.float32), ((0, h_pad - h), (0, h_pad - h)))
    b2 = jnp.pad(params["b2"].astype(jnp.float32), ((0, 0), (0, h_pad - h)))
    w3 = jnp.pad(params["w3"].astype(jnp.float32).T, ((0, 0), (0, h_pad - h)))  # (1, H_pad)
    b3 = params["b3"].astype(jnp.float32).reshape(1, 1)

    vmem_limit = int(min(96 << 20,
                         max(32 << 20,
                             2 * (tm * d * 4 + tm * 4)
                             + 2 * g_pad * (d + 1) * 4 + (4 << 20))))

    # ---- pass 1: per-core partial segment sums -------------------------------
    s_part, cnt_part = pl.pallas_call(
        _segment_reduce_kernel,
        out_shape=(jax.ShapeDtypeStruct((nc, g_pad, d), jnp.float32),
                   jax.ShapeDtypeStruct((nc, g_pad, 1), jnp.float32)),
        grid_spec=pltpu.PrefetchScalarGridSpec(
            num_scalar_prefetch=0,
            grid=(nc, t_per_core),
            in_specs=[
                pl.BlockSpec((1, tm), lambda c, i: (0, c * t_per_core + i)),   # batch row
                pl.BlockSpec((tm, d), lambda c, i: (c * t_per_core + i, 0)),   # x row tile
            ],
            out_specs=[
                pl.BlockSpec((None, g_pad, d), lambda c, i: (c, 0, 0)),        # partial S
                pl.BlockSpec((None, g_pad, 1), lambda c, i: (c, 0, 0)),        # partial counts
            ],
        ),
        compiler_params=pltpu.CompilerParams(
            dimension_semantics=("parallel", "arbitrary"),
            vmem_limit_bytes=vmem_limit,
        ),
        cost_estimate=pl.CostEstimate(
            flops=4 * n_pad * g_pad * d,          # two bf16 passes
            transcendentals=0,
            bytes_accessed=4 * (n_pad * d + n_pad + 2 * nc * g_pad * (d + 1)),
        ),
    )(batch_row, x_p)

    # ---- pass 2: tiny per-graph head (grid-less, all operands in VMEM) -------
    conf_g = pl.pallas_call(
        _head_kernel,
        out_shape=jax.ShapeDtypeStruct((g_pad, 1), jnp.float32),
        compiler_params=pltpu.CompilerParams(vmem_limit_bytes=32 << 20),
        cost_estimate=pl.CostEstimate(
            flops=2 * g_pad * d * h_pad + 2 * g_pad * h_pad * h_pad + 2 * g_pad * h_pad,
            transcendentals=2 * g_pad,
            bytes_accessed=4 * (nc * g_pad * (d + 1) + d * h_pad + h_pad * h_pad
                                + 3 * h_pad + g_pad),
        ),
    )(s_part, cnt_part, w1, b1, w2, b2, w3, b3)

    # Per-node scatter is a trivial XLA gather on the tiny per-graph table
    # (review: O(1)/node, removes an entire pallas_call of O(N*G) VPU/XLU work).
    return conf_g[batch]                                          # (N, 1)


def init_params(key, in_dim):
    """Deterministic nn.Linear-style init; weights stored as (in, out)."""
    hidden = 2 * in_dim
    ks = jax.random.split(key, 6)

    def lin(kw, kb, fan_in, fan_out):
        bound = 1.0 / jnp.sqrt(fan_in)
        w = jax.random.uniform(kw, (fan_in, fan_out), jnp.float32, -bound, bound)
        b = jax.random.uniform(kb, (1, fan_out), jnp.float32, -bound, bound)
        return w, b

    w1, b1 = lin(ks[0], ks[1], in_dim, hidden)
    w2, b2 = lin(ks[2], ks[3], hidden, hidden)
    w3, b3 = lin(ks[4], ks[5], hidden, 1)
    return dict(w1=w1, b1=b1, w2=w2, b2=b2, w3=w3, b3=b3)


def reference(x, batch, p):
    adj = (batch[:, None] == batch[None, :]).astype(jnp.float32)
    hp = jax.lax.Precision.HIGHEST
    h = jnp.maximum(jnp.dot(jnp.dot(adj, x, precision=hp), p["w1"], precision=hp) + p["b1"], 0.0)
    h = jnp.maximum(jnp.dot(jnp.dot(adj, h, precision=hp), p["w2"], precision=hp) + p["b2"], 0.0)
    logit = jnp.dot(h, p["w3"], precision=hp) + p["b3"]
    sp = jax.nn.softplus(logit)
    return sp / (1.0 + sp)


if __name__ == "__main__":
    key = jax.random.PRNGKey(0)
    k_x, k_p = jax.random.split(key)

    num_nodes, in_dim = 16, 32
    x = jax.random.normal(k_x, (num_nodes, in_dim), jnp.float32)
    # 3 graphs: 5 + 6 + 5 nodes
    batch = jnp.array([0] * 5 + [1] * 6 + [2] * 5, dtype=jnp.int32)

    params = init_params(k_p, in_dim)

    out = confidence_score(x, batch, params)
    out = jax.block_until_ready(out)

    ref = reference(x, batch, params)
    assert out.shape == (num_nodes, 1)
    assert jnp.allclose(out, ref, atol=1e-4, rtol=1e-4), "mismatch vs JAX reference"

    print("KERNEL_OK")
</pallas_src>

<mosaic_0001>
module attributes {stable_mosaic.version = 11 : i64} {
  func.func @_segment_reduce_kernel(%arg0: i32, %arg1: i32, %arg2: memref<1x128xi32, #tpu.memory_space<vmem>>, %arg3: memref<128x32xf32, #tpu.memory_space<vmem>>, %arg4: memref<1x8x32xf32, #tpu.memory_space<vmem>>, %arg5: memref<1x8x1xf32, #tpu.memory_space<vmem>>) attributes {dimension_semantics = [#tpu.dimension_semantics<parallel>, #tpu.dimension_semantics<arbitrary>], iteration_bounds = array<i64: 2, 1>, scalar_prefetch = 0 : i64, scratch_operands = 0 : i64, tpu.core_type = #tpu.core_type<tc>, window_params = [{transform_indices = @transform_0, window_bounds = array<i64: 1, 128>}, {transform_indices = @transform_1, window_bounds = array<i64: 128, 32>}, {transform_indices = @transform_2, window_bounds = array<i64: 1, 8, 32>}, {transform_indices = @transform_3, window_bounds = array<i64: 1, 8, 1>}]} {
    %c0_i32 = arith.constant 0 : i32
    %0 = arith.cmpi eq, %arg1, %c0_i32 : i32
    %1 = arith.extui %0 : i1 to i32
    %c0_i32_0 = arith.constant 0 : i32
    %2 = arith.cmpi ne, %1, %c0_i32_0 : i32
    scf.if %2 {
      %cst_18 = arith.constant 0.000000e+00 : f32
      %34 = vector.broadcast %cst_18 : f32 to vector<8x32xf32>
      %c0_19 = arith.constant 0 : index
      %c0_20 = arith.constant 0 : index
      %c0_21 = arith.constant 0 : index
      %35 = vector.load %arg4[%c0_19, %c0_20, %c0_21] : memref<1x8x32xf32, #tpu.memory_space<vmem>>, vector<1x8x32xf32>
      %36 = vector.shape_cast %35 : vector<1x8x32xf32> to vector<8x32xf32>
      %37 = vector.shape_cast %34 : vector<8x32xf32> to vector<1x8x32xf32>
      tpu.vector_store %arg4[%c0_19, %c0_20, %c0_21], %37 {strides = array<i32>} : memref<1x8x32xf32, #tpu.memory_space<vmem>>, vector<1x8x32xf32>,
      %cst_22 = arith.constant 0.000000e+00 : f32
      %38 = vector.broadcast %cst_22 : f32 to vector<8x1xf32>
      %c0_23 = arith.constant 0 : index
      %c0_24 = arith.constant 0 : index
      %c0_25 = arith.constant 0 : index
      %39 = vector.load %arg5[%c0_23, %c0_24, %c0_25] : memref<1x8x1xf32, #tpu.memory_space<vmem>>, vector<1x8x1xf32>
      %40 = vector.shape_cast %39 : vector<1x8x1xf32> to vector<8x1xf32>
      %41 = vector.shape_cast %38 : vector<8x1xf32> to vector<1x8x1xf32>
      tpu.vector_store %arg5[%c0_23, %c0_24, %c0_25], %41 {strides = array<i32>} : memref<1x8x1xf32, #tpu.memory_space<vmem>>, vector<1x8x1xf32>,
    } else {
    }
    %c0 = arith.constant 0 : index
    %c0_1 = arith.constant 0 : index
    %3 = vector.load %arg2[%c0, %c0_1] : memref<1x128xi32, #tpu.memory_space<vmem>>, vector<1x128xi32>
    %4 = tpu.iota {dimensions = array<i32: 0>} : vector<8x128xi32>
    %5 = vector.broadcast %3 : vector<1x128xi32> to vector<8x128xi32>
    %6 = arith.cmpi eq, %4, %5 : vector<8x128xi32>
    %7 = arith.extui %6 : vector<8x128xi1> to vector<8x128xi32>
    %8 = arith.sitofp %7 : vector<8x128xi32> to vector<8x128xf32>
    %9 = arith.truncf %8 : vector<8x128xf32> to vector<8x128xbf16>
    %c0_2 = arith.constant 0 : index
    %c0_3 = arith.constant 0 : index
    %10 = vector.load %arg3[%c0_2, %c0_3] : memref<128x32xf32, #tpu.memory_space<vmem>>, vector<128x32xf32>
    %11 = arith.truncf %10 : vector<128x32xf32> to vector<128x32xbf16>
    %12 = arith.extf %11 : vector<128x32xbf16> to vector<128x32xf32>
    %13 = arith.subf %10, %12 : vector<128x32xf32>
    %14 = arith.truncf %13 : vector<128x32xf32> to vector<128x32xbf16>
    %c0_4 = arith.constant 0 : index
    %c0_5 = arith.constant 0 : index
    %c0_6 = arith.constant 0 : index
    %15 = vector.load %arg4[%c0_4, %c0_5, %c0_6] : memref<1x8x32xf32, #tpu.memory_space<vmem>>, vector<1x8x32xf32>
    %16 = vector.shape_cast %15 : vector<1x8x32xf32> to vector<8x32xf32>
    %cst = arith.constant dense<0.000000e+00> : vector<8x32xf32>
    %17 = tpu.matmul %9, %11, %cst {dimension_numbers = #tpu.dot_dimension_numbers<[1], [0], [0], [1], [0, 0, 1, 1], [], []>} : vector<8x128xbf16>, vector<128x32xbf16>, vector<8x32xf32> -> vector<8x32xf32>
    %cst_7 = arith.constant dense<0.000000e+00> : vector<8x32xf32>
    %18 = tpu.matmul %9, %14, %cst_7 {dimension_numbers = #tpu.dot_dimension_numbers<[1], [0], [0], [1], [0, 0, 1, 1], [], []>} : vector<8x128xbf16>, vector<128x32xbf16>, vector<8x32xf32> -> vector<8x32xf32>
    %19 = arith.addf %17, %18 : vector<8x32xf32>
    %20 = arith.addf %16, %19 : vector<8x32xf32>
    %c0_8 = arith.constant 0 : index
    %c0_9 = arith.constant 0 : index
    %c0_10 = arith.constant 0 : index
    %21 = vector.load %arg4[%c0_8, %c0_9, %c0_10] : memref<1x8x32xf32, #tpu.memory_space<vmem>>, vector<1x8x32xf32>
    %22 = vector.shape_cast %21 : vector<1x8x32xf32> to vector<8x32xf32>
    %23 = vector.shape_cast %20 : vector<8x32xf32> to vector<1x8x32xf32>
    tpu.vector_store %arg4[%c0_8, %c0_9, %c0_10], %23 {strides = array<i32>} : memref<1x8x32xf32, #tpu.memory_space<vmem>>, vector<1x8x32xf32>,
    %c0_11 = arith.constant 0 : index
    %c0_12 = arith.constant 0 : index
    %c0_13 = arith.constant 0 : index
    %24 = vector.load %arg5[%c0_11, %c0_12, %c0_13] : memref<1x8x1xf32, #tpu.memory_space<vmem>>, vector<1x8x1xf32>
    %25 = vector.shape_cast %24 : vector<1x8x1xf32> to vector<8x1xf32>
    %26 = arith.extui %6 : vector<8x128xi1> to vector<8x128xi32>
    %27 = arith.sitofp %26 : vector<8x128xi32> to vector<8x128xf32>
    %cst_14 = arith.constant dense<0.000000e+00> : vector<8xf32>
    %28 = vector.multi_reduction <add>, %27, %cst_14 [1] : vector<8x128xf32> to vector<8xf32>
    %29 = vector.shape_cast %28 : vector<8xf32> to vector<8x1xf32>
    %30 = arith.addf %25, %29 : vector<8x1xf32>
    %c0_15 = arith.constant 0 : index
    %c0_16 = arith.constant 0 : index
    %c0_17 = arith.constant 0 : index
    %31 = vector.load %arg5[%c0_15, %c0_16, %c0_17] : memref<1x8x1xf32, #tpu.memory_space<vmem>>, vector<1x8x1xf32>
    %32 = vector.shape_cast %31 : vector<1x8x1xf32> to vector<8x1xf32>
    %33 = vector.shape_cast %30 : vector<8x1xf32> to vector<1x8x1xf32>
    tpu.vector_store %arg5[%c0_15, %c0_16, %c0_17], %33 {strides = array<i32>} : memref<1x8x1xf32, #tpu.memory_space<vmem>>, vector<1x8x1xf32>,
    return
  }
  func.func @transform_0(%arg0: i32, %arg1: i32) -> (i32, i32) {
    %c1_i32 = arith.constant 1 : i32
    %0 = arith.muli %arg0, %c1_i32 : i32
    %1 = arith.addi %0, %arg1 : i32
    %c0_i32 = arith.constant 0 : i32
    %c0_i32_0 = arith.constant 0 : i32
    return %c0_i32, %1 : i32, i32
  }
  func.func @transform_1(%arg0: i32, %arg1: i32) -> (i32, i32) {
    %c1_i32 = arith.constant 1 : i32
    %0 = arith.muli %arg0, %c1_i32 : i32
    %1 = arith.addi %0, %arg1 : i32
    %c0_i32 = arith.constant 0 : i32
    %c0_i32_0 = arith.constant 0 : i32
    return %1, %c0_i32 : i32, i32
  }
  func.func @transform_2(%arg0: i32, %arg1: i32) -> (i32, i32, i32) {
    %c0_i32 = arith.constant 0 : i32
    %c0_i32_0 = arith.constant 0 : i32
    %c0_i32_1 = arith.constant 0 : i32
    return %arg0, %c0_i32, %c0_i32_0 : i32, i32, i32
  }
  func.func @transform_3(%arg0: i32, %arg1: i32) -> (i32, i32, i32) {
    %c0_i32 = arith.constant 0 : i32
    %c0_i32_0 = arith.constant 0 : i32
    %c0_i32_1 = arith.constant 0 : i32
    return %arg0, %c0_i32, %c0_i32_0 : i32, i32, i32
  }
}

</mosaic_0001>

<llo_original>
// kernel: tpu_custom_call.1
$region0: #{tpu_custom_call.1}
  #allocation0 [shape = 'u32[]', space=smem, size = 0x4, offset = 0x4, fixed_abs, tag = 'smem constant byte address 0x4 - core index']
  #allocation1 [shape = 'u32[72,128]{1,0:T(1,128)}', space=vmem, size = 0x9000, scoped, tag = 'internal scratch']
  %s0 = inlined_call_operand.vmem [shape: s32[1,256], index: 0, kind: input, shape index: {}]
  %s1 = inlined_call_operand.vmem [shape: f32[256,32], index: 1, kind: input, shape index: {}]
  %s2 = inlined_call_operand.hbm [shape: f32[2,8,32], index: 2, kind: output, shape index: {0}]
  %s3 = inlined_call_operand.vmem [shape: f32[2,8,1], index: 3, kind: output, shape index: {1}]
  %4 = xla_tuple %s2, %s3
  %s5 = sld [smem:[#allocation0]]
  $region53: #{tpu_custom_call.1} parent=0
    _
  %s7 = ssub.s32 1, %s5
  %s8 = scalar_select 0, %s7, %s5
  $region1: #{tpu_custom_call.1} parent=0
    #allocation2 [shape = 'u8[8192]{0}', space=vmem, size = 0x2000, scoped, tag = 'output window, operand 0']
    #allocation3 [shape = 's32[2]{0}', space=sflag, size = 0x8, scoped, tag = 'scoped memory for tpu_custom_call.1']
    %9 = vsyncpa [#allocation3], 0
    %s10 = scalar_lea.sflag [#allocation3], 1
    %11 = vsyncpa %s10, 0
    loop: start=0, step=1, limit=4
    $region2: #{tpu_custom_call.1} parent=1 // loop_pre_header
      _
    $region3: #{tpu_custom_call.1} parent=1 // loop_header
      %s13 = sphi 0, %s17
      %p14 = scmp.ge.s32.totalorder %s13, 4
      %s20 = sphi 0, %s32
      %s21 = sphi 0, %s28
      %s22 = sphi 0, %s20
      %s23 = sphi 0, %s21
      %s24 = sphi 0, %s22
      %s25 = sphi 0, %s23
      %s37 = sphi 0, %s39
      %s40 = sphi 0, %s37
      %s41 = sphi 0, %s40
      %s57 = sphi 0, %s41
      %s65 = sphi 0, %s67
      %s68 = sphi 0, %s65
      %s69 = sphi 0, %s68
      %s85 = sphi 0, %s69
      %s91 = sphi 0, %s93
      %s94 = sphi 0, %s91
      %s95 = sphi 0, %s94
      %s111 = sphi 0, %s95
      %s117 = sphi 0, %s119
      %s120 = sphi 0, %s117
      %s121 = sphi 0, %s120
      %s137 = sphi 0, %s121
    $region4: #{tpu_custom_call.1} parent=1 // loop_header_branch
      %16 = sbr.rel (%p14) target = $region8
    $region5: #{tpu_custom_call.1} parent=1 // loop_body
      %s18 = ssub.s32 %s13, 1
      %s19 = ssub.s32 %s13, 2
      %s26 = sadd.s32 1, %s21
      %p27 = scmp.ge.s32.totalorder %s26, 1
      %s28 = scalar_select %p27, 0, %s26
      %s29 = sadd.s32 1, %s20
      %s30 = scalar_select %p27, %s29, %s20
      %p31 = scmp.ge.s32.totalorder %s30, 2
      %s32 = scalar_select %p31, 0, %s30
      %s33 = sadd.s32 %s20, %s21
      %s34 = sadd.s32 %s32, %s28
      %s35 = ssub.s32 %s33, %s34
      %p36 = scmp.eq.s32.totalorder %s35, 0
      %s38 = sadd.s32 %s37, 1
      %s39 = scalar_select %p36, %s37, %s38
      %p42 = pneg %p36
      %p43 = scmp.eq.s32.totalorder %s13, 1
      %p44 = por %p42, %p43
      %p45 = scmp.ne.s32.totalorder %s37, %s40
      %p46 = scmp.eq.s32.totalorder %s13, 0
      %p47 = por %p45, %p46
      %p48 = scmp.ne.s32.totalorder %s37, %s40
      %p49 = scmp.eq.s32.totalorder %s18, 1
      %p50 = por %p48, %p49
      %p51 = scmp.ne.s32.totalorder %s40, %s41
      %p52 = scmp.eq.s32.totalorder %s18, 0
      %p53 = por %p51, %p52
      %p54 = scmp.ne.s32.totalorder %s40, %s41
      %p55 = scmp.eq.s32.totalorder %s19, 1
      %p56 = por %p54, %p55
      %p58 = scmp.ne.s32.totalorder %s41, %s57
      %p59 = scmp.eq.s32.totalorder %s19, 0
      %p60 = por %p58, %p59
      %s61 = sadd.s32 %s20, %s21
      %s62 = sadd.s32 %s32, %s28
      %s63 = ssub.s32 %s61, %s62
      %p64 = scmp.eq.s32.totalorder %s63, 0
      %s66 = sadd.s32 %s65, 1
      %s67 = scalar_select %p64, %s65, %s66
      %p70 = pneg %p64
      %p71 = scmp.eq.s32.totalorder %s13, 1
      %p72 = por %p70, %p71
      %p73 = scmp.ne.s32.totalorder %s65, %s68
      %p74 = scmp.eq.s32.totalorder %s13, 0
      %p75 = por %p73, %p74
      %p76 = scmp.ne.s32.totalorder %s65, %s68
      %p77 = scmp.eq.s32.totalorder %s18, 1
      %p78 = por %p76, %p77
      %p79 = scmp.ne.s32.totalorder %s68, %s69
      %p80 = scmp.eq.s32.totalorder %s18, 0
      %p81 = por %p79, %p80
      %p82 = scmp.ne.s32.totalorder %s68, %s69
      %p83 = scmp.eq.s32.totalorder %s19, 1
      %p84 = por %p82, %p83
      %p86 = scmp.ne.s32.totalorder %s69, %s85
      %p87 = scmp.eq.s32.totalorder %s19, 0
      %p88 = por %p86, %p87
      %s89 = ssub.s32 %s20, %s32
      %p90 = scmp.eq.s32.totalorder %s89, 0
      %s92 = sadd.s32 %s91, 1
      %s93 = scalar_select %p90, %s91, %s92
      %p96 = pneg %p90
      %p97 = scmp.eq.s32.totalorder %s13, 1
      %p98 = por %p96, %p97
      %p99 = scmp.ne.s32.totalorder %s91, %s94
      %p100 = scmp.eq.s32.totalorder %s13, 0
      %p101 = por %p99, %p100
      %p102 = scmp.ne.s32.totalorder %s91, %s94
      %p103 = scmp.eq.s32.totalorder %s18, 1
      %p104 = por %p102, %p103
      %p105 = scmp.ne.s32.totalorder %s94, %s95
      %p106 = scmp.eq.s32.totalorder %s18, 0
      %p107 = por %p105, %p106
      %p108 = scmp.ne.s32.totalorder %s94, %s95
      %p109 = scmp.eq.s32.totalorder %s19, 1
      %p110 = por %p108, %p109
      %p112 = scmp.ne.s32.totalorder %s95, %s111
      %p113 = scmp.eq.s32.totalorder %s19, 0
      %p114 = por %p112, %p113
      %s115 = ssub.s32 %s20, %s32
      %p116 = scmp.eq.s32.totalorder %s115, 0
      %s118 = sadd.s32 %s117, 1
      %s119 = scalar_select %p116, %s117, %s118
      %p122 = pneg %p116
      %p123 = scmp.eq.s32.totalorder %s13, 1
      %p124 = por %p122, %p123
      %p125 = scmp.ne.s32.totalorder %s117, %s120
      %p126 = scmp.eq.s32.totalorder %s13, 0
      %p127 = por %p125, %p126
      %p128 = scmp.ne.s32.totalorder %s117, %s120
      %p129 = scmp.eq.s32.totalorder %s18, 1
      %p130 = por %p128, %p129
      %p131 = scmp.ne.s32.totalorder %s120, %s121
      %p132 = scmp.eq.s32.totalorder %s18, 0
      %p133 = por %p131, %p132
      %p134 = scmp.ne.s32.totalorder %s120, %s121
      %p135 = scmp.eq.s32.totalorder %s19, 1
      %p136 = por %p134, %p135
      %p138 = scmp.ne.s32.totalorder %s121, %s137
      %p139 = scmp.eq.s32.totalorder %s19, 0
      %p140 = por %p138, %p139
      %p141 = scmp.le.s32.totalorder 1, %s13
      %p142 = scmp.lt.s32.totalorder %s13, 3
      %p143 = pnand %p141, %p142
      %p144 = pneg %p143
      // Predicated region
      $region9: #{tpu_custom_call.1} parent=5 // pred_check
        _
      $region10: #{tpu_custom_call.1} parent=5 // pred_check_branch
        %146 = sbr.rel (%p143) target = $region12
      $region11: #{tpu_custom_call.1} parent=5 // pred_region
        %s147 = ssub.s32 %s13, 1
      $region12: #{tpu_custom_call.1} parent=5 // pred_fallthru
        _
      %p148 = scmp.lt.s32.totalorder %s13, 2
      // Predicated region
      $region13: #{tpu_custom_call.1} parent=5 // pred_check
        %p149 = pneg %p148
      $region14: #{tpu_custom_call.1} parent=5 // pred_check_branch
        %151 = sbr.rel (%p149) target = $region16
      $region15: #{tpu_custom_call.1} parent=5 // pred_region
        // Predicated region
        $region17: #{tpu_custom_call.1} parent=15 // pred_check
          %p152 = pneg %p47
        $region18: #{tpu_custom_call.1} parent=15 // pred_check_branch
          %154 = sbr.rel (%p152) target = $region20
        $region19: #{tpu_custom_call.1} parent=15 // pred_region
          %s155 = sadd.s32 %s20, %s21
          %p156 = scmp.lt.s32.totalorder %s155, 1
          %s157 = scalar_select %p156, %s155, 1
          %s158 = scalar_lea.vmem %s0, %s157
          %s159 = sadd.s32 %s20, %s21
        $region20: #{tpu_custom_call.1} parent=15 // pred_fallthru
          _
        // Predicated region
        $region21: #{tpu_custom_call.1} parent=15 // pred_check
          %p160 = pneg %p75
        $region22: #{tpu_custom_call.1} parent=15 // pred_check_branch
          %162 = sbr.rel (%p160) target = $region24
        $region23: #{tpu_custom_call.1} parent=15 // pred_region
          %s163 = sadd.s32 %s20, %s21
          %s164 = smul.u32 16, %s163
          %p165 = scmp.lt.s32.totalorder %s164, 31
          %s166 = scalar_select %p165, %s164, 31
          %s167 = smul.addr %s166, 8
          %s168 = scalar_lea.vmem %s1, %s167
          %s169 = sadd.s32 %s20, %s21
          %s170 = smul.u32 16, %s169
        $region24: #{tpu_custom_call.1} parent=15 // pred_fallthru
          _
      $region16: #{tpu_custom_call.1} parent=5 // pred_fallthru
        _
      %p171 = scmp.le.s32.totalorder 1, %s13
      %p172 = scmp.lt.s32.totalorder %s13, 3
      %p173 = pnand %p171, %p172
      %p174 = pneg %p173
      // Predicated region
      $region25: #{tpu_custom_call.1} parent=5 // pred_check
        _
      $region26: #{tpu_custom_call.1} parent=5 // pred_check_branch
        %176 = sbr.rel (%p173) target = $region28
      $region27: #{tpu_custom_call.1} parent=5 // pred_region
        %s177 = ssub.s32 %s13, 1
        %s178 = sadd.s32 %s22, %s23
        %p179 = scmp.lt.s32.totalorder %s178, 1
        %s180 = scalar_select %p179, %s178, 1
        %s181 = scalar_lea.vmem %s0, %s180
        %p182 = pneg %p53
        %p183 = pneg %p50
        %s184 = sadd.s32 %s22, %s23
        %s185 = smul.u32 16, %s184
        %p186 = scmp.lt.s32.totalorder %s185, 31
        %s187 = scalar_select %p186, %s185, 31
        %s188 = smul.addr %s187, 8
        %s189 = scalar_lea.vmem %s1, %s188
        %p190 = pneg %p81
        %p191 = pneg %p78
        %p192 = pneg %p107
        %p193 = pneg %p104
        %s194 = sand.u32 %s94, 1
        %s195 = scalar_lea.sflag [#allocation3], %s194
        %s196 = sand.u32 %s94, 1
        %s197 = smul.addr %s196, 8
        %s198 = scalar_lea.vmem [#allocation2], %s197
        %p199 = pneg %p133
        %p200 = pneg %p130
        %p201 = scmp.lt.s32.totalorder %s22, 1
        %s202 = scalar_select %p201, %s22, 1
        %s203 = smul.addr %s202, 8
        %s204 = scalar_lea.vmem %s3, %s203
        %s205 = sadd.s32 %s22, %s23
        %p206 = scmp.lt.s32.totalorder %s205, 1
        %s207 = scalar_select %p206, %s205, 1
        %s208 = scalar_lea.vmem %s0, %s207
        %s209 = sadd.s32 %s22, %s23
        %s210 = sadd.s32 %s22, %s23
        %s211 = smul.u32 16, %s210
        %p212 = scmp.lt.s32.totalorder %s211, 31
        %s213 = scalar_select %p212, %s211, 31
        %s214 = smul.addr %s213, 8
        %s215 = scalar_lea.vmem %s1, %s214
        %s216 = sadd.s32 %s22, %s23
        %s217 = smul.u32 16, %s216
        %p218 = scmp.lt.s32.totalorder %s22, 1
        %s219 = scalar_select %p218, %s22, 1
        %s220 = smul.addr %s219, 8
        %s221 = scalar_lea.vmem %s3, %s220
        %p222 = scmp.eq.s32.totalorder %s23, 0
        // Predicated region
        $region29: #{tpu_custom_call.1} parent=27 // pred_check
          %p223 = pneg %p222
        $region30: #{tpu_custom_call.1} parent=27 // pred_check_branch
          %225 = sbr.rel (%p223) target = $region32
        $region31: #{tpu_custom_call.1} parent=27 // pred_region
          %vm226 = vcmask 261120
          %227 = vst.msk [vmem:[%s198] sm:$0xff] %vm226, 0.0
          %vm228 = vcmask 7168
          %229 = vst.msk [vmem:[%s221] sm:$0xff] %vm228, 0.0
        $region32: #{tpu_custom_call.1} parent=27 // pred_fallthru
          _
        %v230 = vld [vmem:[%s208] sm:$0x1]
        %v231 = vlaneseq
        %v232 = vshrl.u32 %v231, 7
        %v233 = vperm.slane %v230, 0
        %vm234 = vcmp.eq.s32.totalorder %v232, %v233
        %v235 = vsel %vm234, 1, 0
        %v236 = vcvt.s32.f32 %v235
        %v237 = vpack.c.bf16 %v236, %v236
        %v238 = vld [vmem:[%s215] sm:$0xff]
        %v239 = vld [vmem:[%s215 + $0x8] sm:$0xff]
        %v240 = vld [vmem:[%s215 + $0x10] sm:$0xff]
        %v241 = vld [vmem:[%s215 + $0x18] sm:$0xff]
        %v242 = vld [vmem:[%s215 + $0x20] sm:$0xff]
        %v243 = vld [vmem:[%s215 + $0x28] sm:$0xff]
        %v244 = vld [vmem:[%s215 + $0x30] sm:$0xff]
        %v245 = vld [vmem:[%s215 + $0x38] sm:$0xff]
        %v246 = vld [vmem:[%s215 + $0x40] sm:$0xff]
        %v247 = vld [vmem:[%s215 + $0x48] sm:$0xff]
        %v248 = vld [vmem:[%s215 + $0x50] sm:$0xff]
        %v249 = vld [vmem:[%s215 + $0x58] sm:$0xff]
        %v250 = vld [vmem:[%s215 + $0x60] sm:$0xff]
        %v251 = vld [vmem:[%s215 + $0x68] sm:$0xff]
        %v252 = vld [vmem:[%s215 + $0x70] sm:$0xff]
        %v253 = vld [vmem:[%s215 + $0x78] sm:$0xff]
        %v254 = vpack.c.bf16 %v238, %v238
        %v255 = vpack.c.bf16 %v239, %v239
        %v256 = vpack.c.bf16 %v240, %v240
        %v257 = vpack.c.bf16 %v241, %v241
        %v258 = vpack.c.bf16 %v242, %v242
        %v259 = vpack.c.bf16 %v243, %v243
        %v260 = vpack.c.bf16 %v244, %v244
        %v261 = vpack.c.bf16 %v245, %v245
        %v262 = vpack.c.bf16 %v246, %v246
        %v263 = vpack.c.bf16 %v247, %v247
        %v264 = vpack.c.bf16 %v248, %v248
        %v265 = vpack.c.bf16 %v249, %v249
        %v266 = vpack.c.bf16 %v250, %v250
        %v267 = vpack.c.bf16 %v251, %v251
        %v268 = vpack.c.bf16 %v252, %v252
        %v269 = vpack.c.bf16 %v253, %v253
        %v270 = vunpack.c.l.bf16 %v254
        %v271 = vunpack.c.l.bf16 %v255
        %v272 = vunpack.c.l.bf16 %v256
        %v273 = vunpack.c.l.bf16 %v257
        %v274 = vunpack.c.l.bf16 %v258
        %v275 = vunpack.c.l.bf16 %v259
        %v276 = vunpack.c.l.bf16 %v260
        %v277 = vunpack.c.l.bf16 %v261
        %v278 = vunpack.c.l.bf16 %v262
        %v279 = vunpack.c.l.bf16 %v263
        %v280 = vunpack.c.l.bf16 %v264
        %v281 = vunpack.c.l.bf16 %v265
        %v282 = vunpack.c.l.bf16 %v266
        %v283 = vunpack.c.l.bf16 %v267
        %v284 = vunpack.c.l.bf16 %v268
        %v285 = vunpack.c.l.bf16 %v269
        %v286 = vsub.f32 %v238, %v270
        %v287 = vsub.f32 %v239, %v271
        %v288 = vsub.f32 %v240, %v272
        %v289 = vsub.f32 %v241, %v273
        %v290 = vsub.f32 %v242, %v274
        %v291 = vsub.f32 %v243, %v275
        %v292 = vsub.f32 %v244, %v276
        %v293 = vsub.f32 %v245, %v277
        %v294 = vsub.f32 %v246, %v278
        %v295 = vsub.f32 %v247, %v279
        %v296 = vsub.f32 %v248, %v280
        %v297 = vsub.f32 %v249, %v281
        %v298 = vsub.f32 %v250, %v282
        %v299 = vsub.f32 %v251, %v283
        %v300 = vsub.f32 %v252, %v284
        %v301 = vsub.f32 %v253, %v285
        %v302 = vpack.c.bf16 %v287, %v286
        %v303 = vpack.c.bf16 %v289, %v288
        %v304 = vpack.c.bf16 %v291, %v290
        %v305 = vpack.c.bf16 %v293, %v292
        %v306 = vpack.c.bf16 %v295, %v294
        %v307 = vpack.c.bf16 %v297, %v296
        %v308 = vpack.c.bf16 %v299, %v298
        %v309 = vpack.c.bf16 %v301, %v300
        %v310 = vld [vmem:[%s198] sm:$0xff]
        %311 = vmatpush.bf16.msra.mxu0 %v309
        %312 = vmatpush.bf16.msra.mxu0 %v308
        %313 = vmatpush.bf16.msra.mxu0 %v307
        %314 = vmatpush.bf16.msra.mxu0 %v306
        %315 = vmatpush.bf16.msra.mxu0 %v305
        %316 = vmatpush.bf16.msra.mxu0 %v304
        %317 = vmatpush.bf16.msra.mxu0 %v303
        %318 = vmatpush.bf16.msra.mxu0 %v302
        %319 = vmatmul.bf16.gmra.mxu0 %v237
        %v320 = vpop.f32.mrf.mxu0
        %v321 = vadd.f32 0.0, %v320
        %v322 = vpop.f32.mrf.mxu0
        %323 = vdwg.mxu0
        %v340 = vunpack.c.l.b16 %v254
        %v341 = vunpack.c.l.b16 %v255
        %v342 = vunpack.c.l.b16 %v256
        %v343 = vunpack.c.l.b16 %v257
        %v344 = vunpack.c.l.b16 %v258
        %v345 = vunpack.c.l.b16 %v259
        %v346 = vunpack.c.l.b16 %v260
        %v347 = vunpack.c.l.b16 %v261
        %v348 = vunpack.c.l.b16 %v262
        %v349 = vunpack.c.l.b16 %v263
        %v350 = vunpack.c.l.b16 %v264
        %v351 = vunpack.c.l.b16 %v265
        %v352 = vunpack.c.l.b16 %v266
        %v353 = vunpack.c.l.b16 %v267
        %v354 = vunpack.c.l.b16 %v268
        %v355 = vunpack.c.l.b16 %v269
        %v356 = vpack.c.b16 %v341, %v340
        %v357 = vpack.c.b16 %v343, %v342
        %v358 = vpack.c.b16 %v345, %v344
        %v359 = vpack.c.b16 %v347, %v346
        %v360 = vpack.c.b16 %v349, %v348
        %v361 = vpack.c.b16 %v351, %v350
        %v362 = vpack.c.b16 %v353, %v352
        %v363 = vpack.c.b16 %v355, %v354
        %372 = vmatpush.bf16.msra.mxu0 %v363
        %373 = vmatpush.bf16.msra.mxu0 %v362
        %374 = vmatpush.bf16.msra.mxu0 %v361
        %375 = vmatpush.bf16.msra.mxu0 %v360
        %376 = vmatpush.bf16.msra.mxu0 %v359
        %377 = vmatpush.bf16.msra.mxu0 %v358
        %378 = vmatpush.bf16.msra.mxu0 %v357
        %379 = vmatpush.bf16.msra.mxu0 %v356
        %380 = vmatmul.bf16.gmra.mxu0 %v237
        %v381 = vpop.f32.mrf.mxu0
        %v382 = vadd.f32 %v321, %v381
        %v383 = vpop.f32.mrf.mxu0
        %384 = vdwg.mxu0
        %v385 = vadd.f32 %v310, %v382
        %vm386 = vcmask 261120
        %387 = vst.msk [vmem:[%s198] sm:$0xff] %vm386, %v385
        %v388 = vld [vmem:[%s221] sm:$0xff]
        %389 = vadd.xlane.f32.xlu0 %v236
        %v390 = vpop.xlane.xlu0 %389
        %v391 = vadd.f32 %v388, %v390
        %vm392 = vcmask 7168
        %393 = vst.msk [vmem:[%s221] sm:$0xff] %vm392, %v391
        %s394 = sand.u32 %s94, 1
        %s395 = scalar_lea.sflag [#allocation3], %s394
        %s396 = sand.u32 %s94, 1
        %s397 = smul.addr %s396, 8
        %s398 = scalar_lea.vmem [#allocation2], %s397
        %p399 = scmp.lt.s32.totalorder %s22, 1
        %s400 = scalar_select %p399, %s22, 1
        %s401 = smul.addr %s400, 8
        %s402 = scalar_lea.vmem %s3, %s401
        // Predicated region
        $region33: #{tpu_custom_call.1} parent=27 // pred_check
          %p403 = pneg %p104
        $region34: #{tpu_custom_call.1} parent=27 // pred_check_branch
          %405 = sbr.rel (%p403) target = $region36
        $region35: #{tpu_custom_call.1} parent=27 // pred_region
          %407 = vsyncadd %s395, 0
          %s408 = smul.addr %s22, 8
          %s409 = scalar_lea.hbm %s2, %s408
          %s411 = sshll.u32 %s398, 4
          %s412 = int_to_ptr.vmem [resolvable:$true] %s411
          %s413 = sshll.u32 %s409, 4
          %s414 = int_to_ptr.hbm [resolvable:$true] %s413
          %416 = dma.vmem_to_hbm [thread:$0]  %s412, 128, %s414, %s395
        $region36: #{tpu_custom_call.1} parent=27 // pred_fallthru
          _
        // Predicated region
        $region37: #{tpu_custom_call.1} parent=27 // pred_check
          %p417 = pneg %p130
        $region38: #{tpu_custom_call.1} parent=27 // pred_check_branch
          %419 = sbr.rel (%p417) target = $region40
        $region39: #{tpu_custom_call.1} parent=27 // pred_region
          _
        $region40: #{tpu_custom_call.1} parent=27 // pred_fallthru
          _
      $region28: #{tpu_custom_call.1} parent=5 // pred_fallthru
        _
      %p420 = scmp.le.s32.totalorder 2, %s13
      // Predicated region
      $region41: #{tpu_custom_call.1} parent=5 // pred_check
        %p421 = pneg %p420
      $region42: #{tpu_custom_call.1} parent=5 // pred_check_branch
        %423 = sbr.rel (%p421) target = $region44
      $region43: #{tpu_custom_call.1} parent=5 // pred_region
        %s424 = ssub.s32 %s13, 2
        // Predicated region
        $region45: #{tpu_custom_call.1} parent=43 // pred_check
          %p425 = pneg %p110
        $region46: #{tpu_custom_call.1} parent=43 // pred_check_branch
          %427 = sbr.rel (%p425) target = $region48
        $region47: #{tpu_custom_call.1} parent=43 // pred_region
          %s428 = sand.u32 %s95, 1
          %s429 = scalar_lea.sflag [#allocation3], %s428
          %s430 = sand.u32 %s95, 1
          %s431 = smul.addr %s430, 8
          %s432 = scalar_lea.vmem [#allocation2], %s431
          %434 = dma.done %s429, 128
        $region48: #{tpu_custom_call.1} parent=43 // pred_fallthru
          _
        // Predicated region
        $region49: #{tpu_custom_call.1} parent=43 // pred_check
          %p435 = pneg %p136
        $region50: #{tpu_custom_call.1} parent=43 // pred_check_branch
          %437 = sbr.rel (%p435) target = $region52
        $region51: #{tpu_custom_call.1} parent=43 // pred_region
          %p438 = scmp.lt.s32.totalorder %s24, 1
          %s439 = scalar_select %p438, %s24, 1
          %s440 = smul.addr %s439, 8
          %s441 = scalar_lea.vmem %s3, %s440
        $region52: #{tpu_custom_call.1} parent=43 // pred_fallthru
          _
      $region44: #{tpu_custom_call.1} parent=5 // pred_fallthru
        _
    $region6: #{tpu_custom_call.1} parent=1 // loop_footer
      %s17 = sadd.s32 1, %s13
    $region7: #{tpu_custom_call.1} parent=1 // loop_footer_branch
      %12 = sbr.rel target = $region3
    $region8: #{tpu_custom_call.1} parent=1 // loop_exit
      _
    %442 = vsyncpa [#allocation3], 1
    %s443 = scalar_lea.sflag [#allocation3], 1
    %444 = vsyncpa %s443, 1

</llo_original>
